<compile_context>
chip_gen: v5e
topology: v5e:2x2
jax: 0.10.0
libtpu: 0.0.40
codegen_flags: <defaults>
</compile_context>

<pallas_src>
import functools
import math

import jax
import jax.numpy as jnp
from jax import lax
from jax.experimental import pallas as pl
from jax.experimental.pallas import tpu as pltpu


# ---------------------------------------------------------------------------
# Pallas kernel: one block-real matmul (+ bias) per row tile
#   out[:, :Cout] = pr@Wre - pi@Wim + (b1 - b2)   (real)
#   out[:, Cout:] = pr@Wim + pi@Wre + (b1 + b2)   (imag)
# ---------------------------------------------------------------------------
def _complex_conv_kernel(p_ref, w_ref, b_ref, o_ref):
    acc = jnp.dot(p_ref[...], w_ref[...], preferred_element_type=jnp.float32)
    o_ref[...] = (acc + b_ref[...]).astype(o_ref.dtype)


# ---------------------------------------------------------------------------
# Plain-JAX glue (fused by XLA under the jit below)
# ---------------------------------------------------------------------------
def _boundary_fix(x):
    """ZeroPad2d(1) + the sequential in-place edge rewrites of the torch code."""
    xp = jnp.pad(x, ((0, 0), (0, 0), (1, 1), (1, 1)))
    # Row fix-ups first (same order as the torch forward), then column fix-ups.
    xp = xp.at[:, :, 0, :].set(xp[:, :, -2, :])
    xp = xp.at[:, :, -1, :].set(xp[:, :, 1, :])
    xp = xp.at[:, :, :, 0].set(xp[:, :, :, 2])
    xp = xp.at[:, :, :, -1].set(xp[:, :, :, 1])
    return xp


def _im2col(x, K, stride, padding):
    """x: [B, C, H, W] -> patches [B*Ho*Wo, C*K*K] ordered (C, kh, kw)."""
    # TODO(synk): fusing this extraction into the kernel (overlapping row
    # windows via pl.Element / manual DMA) would remove the K*K x HBM blow-up.
    if padding:
        x = jnp.pad(x, ((0, 0), (0, 0), (padding, padding), (padding, padding)))
    B, C, H, W = x.shape
    Ho = (H - K) // stride + 1
    Wo = (W - K) // stride + 1
    cols = []
    for kh in range(K):
        for kw in range(K):
            cols.append(x[:, :, kh:kh + stride * Ho:stride,
                          kw:kw + stride * Wo:stride])
    cols = jnp.stack(cols, axis=2)                 # [B, C, K*K, Ho, Wo]
    cols = jnp.transpose(cols, (0, 3, 4, 1, 2))    # [B, Ho, Wo, C, K*K]
    return cols.reshape(B * Ho * Wo, C * K * K), (B, Ho, Wo)


@functools.partial(
    jax.jit,
    static_argnames=("kernel_size", "stride", "padding",
                     "in_channels", "out_channels"))
def _complex_conv2d_forward(x, w1, w2, b1, b2, *, kernel_size, stride, padding,
                            in_channels, out_channels):
    K = kernel_size
    Cout = out_channels
    Kd = in_channels * K * K

    # x: [B, 2, C_in, H, W]  (dim 1 = real / imaginary)
    r = _boundary_fix(x[:, 0])
    i = _boundary_fix(x[:, 1])

    # Stack real/imag along channels -> one im2col pass gives P = [pr | pi].
    # Cast to bf16 before im2col (halves HBM traffic of the patch matrix);
    # accumulation stays f32 inside the kernel.
    ri = jnp.concatenate([r, i], axis=1).astype(jnp.bfloat16)
    P, (B, Ho, Wo) = _im2col(ri, K, stride, padding)

    # Block-real weight matrix  W = [[Wre, Wim], [-Wim, Wre]]  (2Kd, 2Cout).
    wre = jnp.transpose(w1.reshape(Cout, Kd))   # (Kd, Cout)
    wim = jnp.transpose(w2.reshape(Cout, Kd))   # (Kd, Cout)
    W = jnp.concatenate(
        [jnp.concatenate([wre, wim], axis=1),
         jnp.concatenate([-wim, wre], axis=1)], axis=0).astype(jnp.bfloat16)

    # Combined bias, precomputed once (not per grid step).
    b_comb = jnp.concatenate(
        [b1 - b2, b1 + b2]).reshape(1, 2 * Cout).astype(jnp.float32)

    # Row tiling: large tiles for HBM efficiency, shrunk so small problems
    # still get >= 2 grid steps (work for both v7x TensorCores).
    M = P.shape[0]
    TM = 1024
    while TM > 128 and M <= TM:
        TM //= 2
    Mp = pl.cdiv(M, TM) * TM
    if Mp != M:
        P = jnp.pad(P, ((0, Mp - M), (0, 0)))

    # VMEM budget (double-buffered, worst case):
    #   P block:  2 * TM*2Kd*2B      (~0.3 MiB @ TM=1024, Kd=36)
    #   weights:  2Kd*2Cout*2B       (negligible at these sizes)
    #   output:   2 * TM*2Cout*4B
    # -> far under the 32 MiB scoped limit on every generation (v7x incl.).
    out = pl.pallas_call(
        _complex_conv_kernel,
        out_shape=jax.ShapeDtypeStruct((Mp, 2 * Cout), jnp.float32),
        grid_spec=pltpu.PrefetchScalarGridSpec(
            num_scalar_prefetch=0,
            grid=(Mp // TM,),
            in_specs=[
                pl.BlockSpec((TM, 2 * Kd), lambda m: (m, 0)),
                pl.BlockSpec((2 * Kd, 2 * Cout), lambda m: (0, 0)),
                pl.BlockSpec((1, 2 * Cout), lambda m: (0, 0)),
            ],
            out_specs=pl.BlockSpec((TM, 2 * Cout), lambda m: (m, 0)),
        ),
        compiler_params=pltpu.CompilerParams(
            dimension_semantics=("parallel",),
            vmem_limit_bytes=32 * 1024 * 1024),
    )(P, W, b_comb)

    out = out[:M]
    real = out[:, :Cout].reshape(B, Ho, Wo, Cout).transpose(0, 3, 1, 2)
    imag = out[:, Cout:].reshape(B, Ho, Wo, Cout).transpose(0, 3, 1, 2)
    return jnp.stack((real, imag), axis=1)   # [B, 2, C_out, Ho, Wo]


class ComplexConv2DPallas:
    """JAX/Pallas port of the PyTorch ComplexConv2D module (groups=1, dilation=1)."""
    # TODO(synk): groups != 1 and dilation != 1 are not implemented.
    # TODO(synk): for very large Cout / Kd add (M, N, K) grid tiling with a
    # VMEM accumulator instead of loading the whole weight block per step.

    def __init__(self, in_channels, out_channels, kernel_size, stride=1,
                 padding=0, bias=True, key=None):
        if key is None:
            key = jax.random.PRNGKey(0)
        self.in_channels = in_channels
        self.out_channels = out_channels
        self.kernel_size = kernel_size
        self.stride = stride
        self.padding = padding

        k1, k2, k3, k4 = jax.random.split(key, 4)
        fan_in = in_channels * kernel_size * kernel_size
        bound = 1.0 / math.sqrt(fan_in)
        wshape = (out_channels, in_channels, kernel_size, kernel_size)
        self.weight1 = jax.random.uniform(k1, wshape, jnp.float32, -bound, bound)
        self.weight2 = jax.random.uniform(k2, wshape, jnp.float32, -bound, bound)
        if bias:
            self.bias1 = jax.random.uniform(k3, (out_channels,), jnp.float32, -bound, bound)
            self.bias2 = jax.random.uniform(k4, (out_channels,), jnp.float32, -bound, bound)
        else:
            self.bias1 = jnp.zeros((out_channels,), jnp.float32)
            self.bias2 = jnp.zeros((out_channels,), jnp.float32)

    def __call__(self, x):
        return _complex_conv2d_forward(
            x, self.weight1, self.weight2, self.bias1, self.bias2,
            kernel_size=self.kernel_size, stride=self.stride,
            padding=self.padding, in_channels=self.in_channels,
            out_channels=self.out_channels)


# ---------------------------------------------------------------------------
# Pure-JAX reference (same semantics, XLA conv, f32 highest precision)
# ---------------------------------------------------------------------------
def _ref_forward(x, w1, w2, b1, b2, stride, padding):
    r = _boundary_fix(x[:, 0])
    i = _boundary_fix(x[:, 1])

    def conv(inp, w, b):
        out = lax.conv_general_dilated(
            inp, w, (stride, stride), [(padding, padding)] * 2,
            dimension_numbers=('NCHW', 'OIHW', 'NCHW'),
            precision=lax.Precision.HIGHEST)
        return out + b[None, :, None, None]

    real = conv(r, w1, b1) - conv(i, w2, b2)
    imag = conv(i, w1, b1) + conv(r, w2, b2)
    return jnp.stack((real, imag), axis=1)


if __name__ == "__main__":
    B, Cin, Cout, K, H, W = 2, 4, 4, 3, 16, 16

    key = jax.random.PRNGKey(0)
    kx, kp = jax.random.split(key)
    x = jax.random.normal(kx, (B, 2, Cin, H, W), jnp.float32)

    mod = ComplexConv2DPallas(Cin, Cout, K, stride=1, padding=0, bias=True, key=kp)

    out = mod(x)
    out = jax.block_until_ready(out)

    ref = _ref_forward(x, mod.weight1, mod.weight2, mod.bias1, mod.bias2,
                       stride=1, padding=0)
    ref = jax.block_until_ready(ref)

    assert out.shape == (B, 2, Cout, H, W), out.shape
    # bf16 inputs on the MXU -> tolerance loosened vs the f32 reference.
    assert jnp.allclose(out, ref, atol=2e-2, rtol=2e-2), \
        float(jnp.max(jnp.abs(out - ref)))

    print("KERNEL_OK")
</pallas_src>

<mosaic_0001>
module attributes {stable_mosaic.version = 11 : i64} {
  func.func @_complex_conv_kernel(%arg0: i32, %arg1: memref<256x72xbf16, #tpu.memory_space<vmem>>, %arg2: memref<72x8xbf16, #tpu.memory_space<vmem>>, %arg3: memref<1x8xf32, #tpu.memory_space<vmem>>, %arg4: memref<256x8xf32, #tpu.memory_space<vmem>>) attributes {dimension_semantics = [#tpu.dimension_semantics<parallel>], iteration_bounds = array<i64: 2>, scalar_prefetch = 0 : i64, scratch_operands = 0 : i64, tpu.core_type = #tpu.core_type<tc>, window_params = [{transform_indices = @transform_0, window_bounds = array<i64: 256, 72>}, {pipeline_mode = #tpu.pipeline_mode<synchronous>, transform_indices = @transform_1, window_bounds = array<i64: 72, 8>}, {pipeline_mode = #tpu.pipeline_mode<synchronous>, transform_indices = @transform_2, window_bounds = array<i64: 1, 8>}, {transform_indices = @transform_3, window_bounds = array<i64: 256, 8>}]} {
    %c0 = arith.constant 0 : index
    %c0_0 = arith.constant 0 : index
    %0 = vector.load %arg1[%c0, %c0_0] : memref<256x72xbf16, #tpu.memory_space<vmem>>, vector<256x72xbf16>
    %c0_1 = arith.constant 0 : index
    %c0_2 = arith.constant 0 : index
    %1 = vector.load %arg2[%c0_1, %c0_2] : memref<72x8xbf16, #tpu.memory_space<vmem>>, vector<72x8xbf16>
    %cst = arith.constant dense<0.000000e+00> : vector<256x8xf32>
    %2 = tpu.matmul %0, %1, %cst {dimension_numbers = #tpu.dot_dimension_numbers<[1], [0], [0], [1], [0, 0, 1, 1], [], []>} : vector<256x72xbf16>, vector<72x8xbf16>, vector<256x8xf32> -> vector<256x8xf32>
    %c0_3 = arith.constant 0 : index
    %c0_4 = arith.constant 0 : index
    %3 = vector.load %arg3[%c0_3, %c0_4] : memref<1x8xf32, #tpu.memory_space<vmem>>, vector<1x8xf32>
    %4 = vector.broadcast %3 : vector<1x8xf32> to vector<256x8xf32>
    %5 = arith.addf %2, %4 : vector<256x8xf32>
    %c0_5 = arith.constant 0 : index
    %c0_6 = arith.constant 0 : index
    %6 = vector.load %arg4[%c0_5, %c0_6] : memref<256x8xf32, #tpu.memory_space<vmem>>, vector<256x8xf32>
    tpu.vector_store %arg4[%c0_5, %c0_6], %5 {strides = array<i32>} : memref<256x8xf32, #tpu.memory_space<vmem>>, vector<256x8xf32>,
    return
  }
  func.func @transform_0(%arg0: i32) -> (i32, i32) {
    %c0_i32 = arith.constant 0 : i32
    %c0_i32_0 = arith.constant 0 : i32
    return %arg0, %c0_i32 : i32, i32
  }
  func.func @transform_1(%arg0: i32) -> (i32, i32) {
    %c0_i32 = arith.constant 0 : i32
    %c0_i32_0 = arith.constant 0 : i32
    %c0_i32_1 = arith.constant 0 : i32
    return %c0_i32, %c0_i32_0 : i32, i32
  }
  func.func @transform_2(%arg0: i32) -> (i32, i32) {
    %c0_i32 = arith.constant 0 : i32
    %c0_i32_0 = arith.constant 0 : i32
    %c0_i32_1 = arith.constant 0 : i32
    return %c0_i32, %c0_i32_0 : i32, i32
  }
  func.func @transform_3(%arg0: i32) -> (i32, i32) {
    %c0_i32 = arith.constant 0 : i32
    %c0_i32_0 = arith.constant 0 : i32
    return %arg0, %c0_i32 : i32, i32
  }
}

</mosaic_0001>

<llo_original>
// kernel: _complex_conv2d_forward.1
$region0: #{_complex_conv2d_forward.1}
  #allocation0 [shape = 'u32[]', space=smem, size = 0x4, offset = 0x4, fixed_abs, tag = 'smem constant byte address 0x4 - core index']
  #allocation1 [shape = 'u32[72,128]{1,0:T(1,128)}', space=vmem, size = 0x9000, scoped, tag = 'internal scratch']
  %s0 = inlined_call_operand.vmem [shape: bf16[512,72], index: 0, kind: input, shape index: {}]
  %s1 = inlined_call_operand.vmem [shape: bf16[72,8], index: 1, kind: input, shape index: {}]
  %s2 = inlined_call_operand.vmem [shape: f32[1,8], index: 2, kind: input, shape index: {}]
  %s3 = inlined_call_operand.vmem [shape: f32[512,8], index: 3, kind: output, shape index: {}]
  %s4 = sld [smem:[#allocation0]]
  $region45: #{_complex_conv2d_forward.1} parent=0
    _
  %s6 = ssub.s32 1, %s4
  %s7 = scalar_select 0, %s6, %s4
  loop: start=0, step=1, limit=4
  $region2: #{_complex_conv2d_forward.1} parent=0 // loop_pre_header
    _
  $region3: #{_complex_conv2d_forward.1} parent=0 // loop_header
    %s9 = sphi 0, %s13
    %p10 = scmp.ge.s32.totalorder %s9, 4
    %s19 = sphi 0, %s21
    %s22 = sphi 0, %s19
    %s23 = sphi 0, %s22
    %s39 = sphi 0, %s23
    %s43 = sphi 0, %s43
    %s45 = sphi 0, %s43
    %s46 = sphi 0, %s45
    %s60 = sphi 0, %s46
    %s64 = sphi 0, %s64
    %s66 = sphi 0, %s64
    %s67 = sphi 0, %s66
    %s81 = sphi 0, %s67
    %s87 = sphi 0, %s89
    %s90 = sphi 0, %s87
    %s91 = sphi 0, %s90
    %s107 = sphi 0, %s91
  $region4: #{_complex_conv2d_forward.1} parent=0 // loop_header_branch
    %12 = sbr.rel (%p10) target = $region8
  $region5: #{_complex_conv2d_forward.1} parent=0 // loop_body
    %s14 = ssub.s32 %s9, 1
    %s15 = ssub.s32 %s9, 2
    %s16 = sadd.s32 %s9, 1
    %s17 = ssub.s32 %s9, %s16
    %p18 = scmp.eq.s32.totalorder %s17, 0
    %s20 = sadd.s32 %s19, 1
    %s21 = scalar_select %p18, %s19, %s20
    %p24 = pneg %p18
    %p25 = scmp.eq.s32.totalorder %s9, 1
    %p26 = por %p24, %p25
    %p27 = scmp.ne.s32.totalorder %s19, %s22
    %p28 = scmp.eq.s32.totalorder %s9, 0
    %p29 = por %p27, %p28
    %p30 = scmp.ne.s32.totalorder %s19, %s22
    %p31 = scmp.eq.s32.totalorder %s14, 1
    %p32 = por %p30, %p31
    %p33 = scmp.ne.s32.totalorder %s22, %s23
    %p34 = scmp.eq.s32.totalorder %s14, 0
    %p35 = por %p33, %p34
    %p36 = scmp.ne.s32.totalorder %s22, %s23
    %p37 = scmp.eq.s32.totalorder %s15, 1
    %p38 = por %p36, %p37
    %p40 = scmp.ne.s32.totalorder %s23, %s39
    %p41 = scmp.eq.s32.totalorder %s15, 0
    %p42 = por %p40, %p41
    %s44 = sadd.s32 %s43, 1
    %p47 = scmp.eq.s32.totalorder %s9, 1
    %p48 = scmp.ne.s32.totalorder %s43, %s45
    %p49 = scmp.eq.s32.totalorder %s9, 0
    %p50 = por %p48, %p49
    %p51 = scmp.ne.s32.totalorder %s43, %s45
    %p52 = scmp.eq.s32.totalorder %s14, 1
    %p53 = por %p51, %p52
    %p54 = scmp.ne.s32.totalorder %s45, %s46
    %p55 = scmp.eq.s32.totalorder %s14, 0
    %p56 = por %p54, %p55
    %p57 = scmp.ne.s32.totalorder %s45, %s46
    %p58 = scmp.eq.s32.totalorder %s15, 1
    %p59 = por %p57, %p58
    %p61 = scmp.ne.s32.totalorder %s46, %s60
    %p62 = scmp.eq.s32.totalorder %s15, 0
    %p63 = por %p61, %p62
    %s65 = sadd.s32 %s64, 1
    %p68 = scmp.eq.s32.totalorder %s9, 1
    %p69 = scmp.ne.s32.totalorder %s64, %s66
    %p70 = scmp.eq.s32.totalorder %s9, 0
    %p71 = por %p69, %p70
    %p72 = scmp.ne.s32.totalorder %s64, %s66
    %p73 = scmp.eq.s32.totalorder %s14, 1
    %p74 = por %p72, %p73
    %p75 = scmp.ne.s32.totalorder %s66, %s67
    %p76 = scmp.eq.s32.totalorder %s14, 0
    %p77 = por %p75, %p76
    %p78 = scmp.ne.s32.totalorder %s66, %s67
    %p79 = scmp.eq.s32.totalorder %s15, 1
    %p80 = por %p78, %p79
    %p82 = scmp.ne.s32.totalorder %s67, %s81
    %p83 = scmp.eq.s32.totalorder %s15, 0
    %p84 = por %p82, %p83
    %s85 = ssub.s32 %s9, %s16
    %p86 = scmp.eq.s32.totalorder %s85, 0
    %s88 = sadd.s32 %s87, 1
    %s89 = scalar_select %p86, %s87, %s88
    %p92 = pneg %p86
    %p93 = scmp.eq.s32.totalorder %s9, 1
    %p94 = por %p92, %p93
    %p95 = scmp.ne.s32.totalorder %s87, %s90
    %p96 = scmp.eq.s32.totalorder %s9, 0
    %p97 = por %p95, %p96
    %p98 = scmp.ne.s32.totalorder %s87, %s90
    %p99 = scmp.eq.s32.totalorder %s14, 1
    %p100 = por %p98, %p99
    %p101 = scmp.ne.s32.totalorder %s90, %s91
    %p102 = scmp.eq.s32.totalorder %s14, 0
    %p103 = por %p101, %p102
    %p104 = scmp.ne.s32.totalorder %s90, %s91
    %p105 = scmp.eq.s32.totalorder %s15, 1
    %p106 = por %p104, %p105
    %p108 = scmp.ne.s32.totalorder %s91, %s107
    %p109 = scmp.eq.s32.totalorder %s15, 0
    %p110 = por %p108, %p109
    %p111 = scmp.le.s32.totalorder 1, %s9
    %p112 = scmp.lt.s32.totalorder %s9, 3
    %p113 = pnand %p111, %p112
    %p114 = pneg %p113
    // Predicated region
    $region9: #{_complex_conv2d_forward.1} parent=5 // pred_check
      _
    $region10: #{_complex_conv2d_forward.1} parent=5 // pred_check_branch
      %116 = sbr.rel (%p113) target = $region12
    $region11: #{_complex_conv2d_forward.1} parent=5 // pred_region
      %s117 = ssub.s32 %s9, 1
      // Predicated region
      $region13: #{_complex_conv2d_forward.1} parent=11 // pred_check
        %p118 = pneg %p56
      $region14: #{_complex_conv2d_forward.1} parent=11 // pred_check_branch
        %120 = sbr.rel (%p118) target = $region16
      $region15: #{_complex_conv2d_forward.1} parent=11 // pred_region
        _
      $region16: #{_complex_conv2d_forward.1} parent=11 // pred_fallthru
        _
      // Predicated region
      $region17: #{_complex_conv2d_forward.1} parent=11 // pred_check
        %p121 = pneg %p77
      $region18: #{_complex_conv2d_forward.1} parent=11 // pred_check_branch
        %123 = sbr.rel (%p121) target = $region20
      $region19: #{_complex_conv2d_forward.1} parent=11 // pred_region
        _
      $region20: #{_complex_conv2d_forward.1} parent=11 // pred_fallthru
        _
    $region12: #{_complex_conv2d_forward.1} parent=5 // pred_fallthru
      _
    %p124 = scmp.lt.s32.totalorder %s9, 2
    // Predicated region
    $region21: #{_complex_conv2d_forward.1} parent=5 // pred_check
      %p125 = pneg %p124
    $region22: #{_complex_conv2d_forward.1} parent=5 // pred_check_branch
      %127 = sbr.rel (%p125) target = $region24
    $region23: #{_complex_conv2d_forward.1} parent=5 // pred_region
      // Predicated region
      $region25: #{_complex_conv2d_forward.1} parent=23 // pred_check
        %p128 = pneg %p29
      $region26: #{_complex_conv2d_forward.1} parent=23 // pred_check_branch
        %130 = sbr.rel (%p128) target = $region28
      $region27: #{_complex_conv2d_forward.1} parent=23 // pred_region
        %s131 = smul.u32 32, %s9
        %p132 = scmp.lt.s32.totalorder %s131, 63
        %s133 = scalar_select %p132, %s131, 63
        %s134 = smul.addr %s133, 4
        %s135 = scalar_lea.vmem %s0, %s134
        %s136 = smul.u32 32, %s9
      $region28: #{_complex_conv2d_forward.1} parent=23 // pred_fallthru
        _
    $region24: #{_complex_conv2d_forward.1} parent=5 // pred_fallthru
      _
    %p137 = scmp.le.s32.totalorder 1, %s9
    %p138 = scmp.lt.s32.totalorder %s9, 3
    %p139 = pnand %p137, %p138
    %p140 = pneg %p139
    // Predicated region
    $region29: #{_complex_conv2d_forward.1} parent=5 // pred_check
      _
    $region30: #{_complex_conv2d_forward.1} parent=5 // pred_check_branch
      %142 = sbr.rel (%p139) target = $region32
    $region31: #{_complex_conv2d_forward.1} parent=5 // pred_region
      %s143 = ssub.s32 %s9, 1
      %s144 = smul.u32 32, %s14
      %p145 = scmp.lt.s32.totalorder %s144, 63
      %s146 = scalar_select %p145, %s144, 63
      %s147 = smul.addr %s146, 4
      %s148 = scalar_lea.vmem %s0, %s147
      %p149 = pneg %p35
      %p150 = pneg %p32
      %p151 = pneg %p56
      %p152 = pneg %p53
      %p153 = pneg %p77
      %p154 = pneg %p74
      %p155 = pneg %p103
      %p156 = pneg %p100
      %s157 = smul.u32 32, %s14
      %p158 = scmp.lt.s32.totalorder %s157, 63
      %s159 = scalar_select %p158, %s157, 63
      %s160 = smul.addr %s159, 8
      %s161 = scalar_lea.vmem %s3, %s160
      %s162 = smul.u32 32, %s14
      %p163 = scmp.lt.s32.totalorder %s162, 63
      %s164 = scalar_select %p163, %s162, 63
      %s165 = smul.addr %s164, 4
      %s166 = scalar_lea.vmem %s0, %s165
      %s167 = smul.u32 32, %s14
      %s168 = smul.u32 32, %s14
      %p169 = scmp.lt.s32.totalorder %s168, 63
      %s170 = scalar_select %p169, %s168, 63
      %s171 = smul.addr %s170, 8
      %s172 = scalar_lea.vmem %s3, %s171
      %s173 = smul.u32 32, %s14
      %v175 = vld [vmem:[%s166] sm:$0xf]
      %v176 = vld [vmem:[%s166 + $0x4] sm:$0xf]
      %v177 = vld [vmem:[%s166 + $0x8] sm:$0xf]
      %v178 = vld [vmem:[%s166 + $0xc] sm:$0xf]
      %v179 = vld [vmem:[%s166 + $0x10] sm:$0xf]
      %v180 = vld [vmem:[%s166 + $0x14] sm:$0xf]
      %v181 = vld [vmem:[%s166 + $0x18] sm:$0xf]
      %v182 = vld [vmem:[%s166 + $0x1c] sm:$0xf]
      %v183 = vld [vmem:[%s166 + $0x20] sm:$0xf]
      %v184 = vld [vmem:[%s166 + $0x24] sm:$0xf]
      %v185 = vld [vmem:[%s166 + $0x28] sm:$0xf]
      %v186 = vld [vmem:[%s166 + $0x2c] sm:$0xf]
      %v187 = vld [vmem:[%s166 + $0x30] sm:$0xf]
      %v188 = vld [vmem:[%s166 + $0x34] sm:$0xf]
      %v189 = vld [vmem:[%s166 + $0x38] sm:$0xf]
      %v190 = vld [vmem:[%s166 + $0x3c] sm:$0xf]
      %v191 = vld [vmem:[%s166 + $0x40] sm:$0xf]
      %v192 = vld [vmem:[%s166 + $0x44] sm:$0xf]
      %v193 = vld [vmem:[%s166 + $0x48] sm:$0xf]
      %v194 = vld [vmem:[%s166 + $0x4c] sm:$0xf]
      %v195 = vld [vmem:[%s166 + $0x50] sm:$0xf]
      %v196 = vld [vmem:[%s166 + $0x54] sm:$0xf]
      %v197 = vld [vmem:[%s166 + $0x58] sm:$0xf]
      %v198 = vld [vmem:[%s166 + $0x5c] sm:$0xf]
      %v199 = vld [vmem:[%s166 + $0x60] sm:$0xf]
      %v200 = vld [vmem:[%s166 + $0x64] sm:$0xf]
      %v201 = vld [vmem:[%s166 + $0x68] sm:$0xf]
      %v202 = vld [vmem:[%s166 + $0x6c] sm:$0xf]
      %v203 = vld [vmem:[%s166 + $0x70] sm:$0xf]
      %v204 = vld [vmem:[%s166 + $0x74] sm:$0xf]
      %v205 = vld [vmem:[%s166 + $0x78] sm:$0xf]
      %v206 = vld [vmem:[%s166 + $0x7c] sm:$0xf]
      %v207 = vld [vmem:[%s1] sm:$0xf]
      %v208 = vld [vmem:[%s1 + $0x4] sm:$0xf]
      %v209 = vld [vmem:[%s1 + $0x8] sm:$0xf]
      %v210 = vld [vmem:[%s1 + $0xc] sm:$0xf]
      %v211 = vld [vmem:[%s1 + $0x10] sm:$0xf]
      %v212 = vld [vmem:[%s1 + $0x14] sm:$0xf]
      %v213 = vld [vmem:[%s1 + $0x18] sm:$0xf]
      %v214 = vld [vmem:[%s1 + $0x1c] sm:$0xf]
      %v215 = vld [vmem:[%s1 + $0x20] sm:$0xf]
      %v216 = vld [vmem:[%s2] sm:$0x1]
      %v218 = vperm.slane %v216, 0
      %v252 = vunpack.c.l.b16 %v175
      %v253 = vunpack.c.l.b16 %v176
      %v254 = vunpack.c.l.b16 %v177
      %v255 = vunpack.c.l.b16 %v178
      %v256 = vunpack.c.l.b16 %v179
      %v257 = vunpack.c.l.b16 %v180
      %v258 = vunpack.c.l.b16 %v181
      %v259 = vunpack.c.l.b16 %v182
      %v260 = vunpack.c.l.b16 %v183
      %v261 = vunpack.c.l.b16 %v184
      %v262 = vunpack.c.l.b16 %v185
      %v263 = vunpack.c.l.b16 %v186
      %v264 = vunpack.c.l.b16 %v187
      %v265 = vunpack.c.l.b16 %v188
      %v266 = vunpack.c.l.b16 %v189
      %v267 = vunpack.c.l.b16 %v190
      %v268 = vunpack.c.l.b16 %v191
      %v269 = vunpack.c.l.b16 %v192
      %v270 = vunpack.c.l.b16 %v193
      %v271 = vunpack.c.l.b16 %v194
      %v272 = vunpack.c.l.b16 %v195
      %v273 = vunpack.c.l.b16 %v196
      %v274 = vunpack.c.l.b16 %v197
      %v275 = vunpack.c.l.b16 %v198
      %v276 = vunpack.c.l.b16 %v199
      %v277 = vunpack.c.l.b16 %v200
      %v278 = vunpack.c.l.b16 %v201
      %v279 = vunpack.c.l.b16 %v202
      %v280 = vunpack.c.l.b16 %v203
      %v281 = vunpack.c.l.b16 %v204
      %v282 = vunpack.c.l.b16 %v205
      %v283 = vunpack.c.l.b16 %v206
      %v284 = vpack.c.b16 %v253, %v252
      %v285 = vpack.c.b16 %v255, %v254
      %v286 = vpack.c.b16 %v257, %v256
      %v287 = vpack.c.b16 %v259, %v258
      %v288 = vpack.c.b16 %v261, %v260
      %v289 = vpack.c.b16 %v263, %v262
      %v290 = vpack.c.b16 %v265, %v264
      %v291 = vpack.c.b16 %v267, %v266
      %v292 = vpack.c.b16 %v269, %v268
      %v293 = vpack.c.b16 %v271, %v270
      %v294 = vpack.c.b16 %v273, %v272
      %v295 = vpack.c.b16 %v275, %v274
      %v296 = vpack.c.b16 %v277, %v276
      %v297 = vpack.c.b16 %v279, %v278
      %v298 = vpack.c.b16 %v281, %v280
      %v299 = vpack.c.b16 %v283, %v282
      %v309 = vunpack.c.l.b16 %v207
      %v310 = vunpack.c.l.b16 %v208
      %v311 = vunpack.c.l.b16 %v209
      %v312 = vunpack.c.l.b16 %v210
      %v313 = vunpack.c.l.b16 %v211
      %v314 = vunpack.c.l.b16 %v212
      %v315 = vunpack.c.l.b16 %v213
      %v316 = vunpack.c.l.b16 %v214
      %v317 = vunpack.c.l.b16 %v215
      %v318 = vpack.c.b16 %v310, %v309
      %v319 = vpack.c.b16 %v312, %v311
      %v320 = vpack.c.b16 %v314, %v313
      %v321 = vpack.c.b16 %v316, %v315
      %v322 = vpack.c.b16 %v317, %v317
      %vm327 = vcmask 588800
      %v329 = vsel %vm327, %v284, 0
      %v332 = vsel %vm327, %v285, 0
      %v335 = vsel %vm327, %v286, 0
      %v338 = vsel %vm327, %v287, 0
      %v341 = vsel %vm327, %v288, 0
      %v344 = vsel %vm327, %v289, 0
      %v347 = vsel %vm327, %v290, 0
      %v350 = vsel %vm327, %v291, 0
      %v353 = vsel %vm327, %v292, 0
      %v356 = vsel %vm327, %v293, 0
      %v359 = vsel %vm327, %v294, 0
      %v362 = vsel %vm327, %v295, 0
      %v365 = vsel %vm327, %v296, 0
      %v368 = vsel %vm327, %v297, 0
      %v371 = vsel %vm327, %v298, 0
      %v374 = vsel %vm327, %v299, 0
      %vm376 = vcmask 1043456
      %v378 = vsel %vm376, %v322, 0
      %380 = vmatpush.bf16.msra.mxu0 0
      %381 = vmatpush.bf16.msra.mxu0 0
      %382 = vmatpush.bf16.msra.mxu0 0
      %383 = vmatpush.bf16.msra.mxu0 %v378
      %384 = vmatpush.bf16.msra.mxu0 %v321
      %385 = vmatpush.bf16.msra.mxu0 %v320
      %386 = vmatpush.bf16.msra.mxu0 %v319
      %387 = vmatpush.bf16.msra.mxu0 %v318
      %388 = vmatmul.bf16.gmra.mxu0 %v329
      %v389 = vpop.f32.mrf.mxu0
      %v390 = vadd.f32 %v218, %v389
      %v391 = vpop.f32.mrf.mxu0
      %v392 = vadd.f32 %v218, %v391
      %393 = vmatmul.bf16.gmra.mxu0 %v332
      %v394 = vpop.f32.mrf.mxu0
      %v395 = vadd.f32 %v218, %v394
      %v396 = vpop.f32.mrf.mxu0
      %v397 = vadd.f32 %v218, %v396
      %398 = vmatmul.bf16.gmra.mxu0 %v335
      %v399 = vpop.f32.mrf.mxu0
      %v400 = vadd.f32 %v218, %v399
      %v401 = vpop.f32.mrf.mxu0
      %v402 = vadd.f32 %v218, %v401
      %403 = vmatmul.bf16.gmra.mxu0 %v338
      %v404 = vpop.f32.mrf.mxu0
      %v405 = vadd.f32 %v218, %v404
      %v406 = vpop.f32.mrf.mxu0
      %v407 = vadd.f32 %v218, %v406
      %408 = vmatmul.bf16.gmra.mxu0 %v341
      %v409 = vpop.f32.mrf.mxu0
      %v410 = vadd.f32 %v218, %v409
      %v411 = vpop.f32.mrf.mxu0
      %v412 = vadd.f32 %v218, %v411
      %413 = vmatmul.bf16.gmra.mxu0 %v344
      %v414 = vpop.f32.mrf.mxu0
      %v415 = vadd.f32 %v218, %v414
      %v416 = vpop.f32.mrf.mxu0
      %v417 = vadd.f32 %v218, %v416
      %418 = vmatmul.bf16.gmra.mxu0 %v347
      %v419 = vpop.f32.mrf.mxu0
      %v420 = vadd.f32 %v218, %v419
      %v421 = vpop.f32.mrf.mxu0
      %v422 = vadd.f32 %v218, %v421
      %423 = vmatmul.bf16.gmra.mxu0 %v350
      %v424 = vpop.f32.mrf.mxu0
      %v425 = vadd.f32 %v218, %v424
      %v426 = vpop.f32.mrf.mxu0
      %v427 = vadd.f32 %v218, %v426
      %428 = vmatmul.bf16.gmra.mxu0 %v353
      %v429 = vpop.f32.mrf.mxu0
      %v430 = vadd.f32 %v218, %v429
      %v431 = vpop.f32.mrf.mxu0
      %v432 = vadd.f32 %v218, %v431
      %433 = vmatmul.bf16.gmra.mxu0 %v356
      %v434 = vpop.f32.mrf.mxu0
      %v435 = vadd.f32 %v218, %v434
      %v436 = vpop.f32.mrf.mxu0
      %v437 = vadd.f32 %v218, %v436
      %438 = vmatmul.bf16.gmra.mxu0 %v359
      %v439 = vpop.f32.mrf.mxu0
      %v440 = vadd.f32 %v218, %v439
      %v441 = vpop.f32.mrf.mxu0
      %v442 = vadd.f32 %v218, %v441
      %443 = vmatmul.bf16.gmra.mxu0 %v362
      %v444 = vpop.f32.mrf.mxu0
      %v445 = vadd.f32 %v218, %v444
      %v446 = vpop.f32.mrf.mxu0
      %v447 = vadd.f32 %v218, %v446
      %448 = vmatmul.bf16.gmra.mxu0 %v365
      %v449 = vpop.f32.mrf.mxu0
      %v450 = vadd.f32 %v218, %v449
      %v451 = vpop.f32.mrf.mxu0
      %v452 = vadd.f32 %v218, %v451
      %453 = vmatmul.bf16.gmra.mxu0 %v368
      %v454 = vpop.f32.mrf.mxu0
      %v455 = vadd.f32 %v218, %v454
      %v456 = vpop.f32.mrf.mxu0
      %v457 = vadd.f32 %v218, %v456
      %458 = vmatmul.bf16.gmra.mxu0 %v371
      %v459 = vpop.f32.mrf.mxu0
      %v460 = vadd.f32 %v218, %v459
      %v461 = vpop.f32.mrf.mxu0
      %v462 = vadd.f32 %v218, %v461
      %463 = vmatmul.bf16.gmra.mxu0 %v374
      %v464 = vpop.f32.mrf.mxu0
      %v465 = vadd.f32 %v218, %v464
      %v466 = vpop.f32.mrf.mxu0
      %v467 = vadd.f32 %v218, %v466
      %468 = vdwg.mxu0
      %vm469 = vcmask 64512
      %470 = vst.msk [vmem:[%s172] sm:$0xff] %vm469, %v390
      %471 = vst.msk [vmem:[%s172 + $0x8] sm:$0xff] %vm469, %v392
      %472 = vst.msk [vmem:[%s172 + $0x10] sm:$0xff] %vm469, %v395
      %473 = vst.msk [vmem:[%s172 + $0x18] sm:$0xff] %vm469, %v397
      %474 = vst.msk [vmem:[%s172 + $0x20] sm:$0xff] %vm469, %v400
      %475 = vst.msk [vmem:[%s172 + $0x28] sm:$0xff] %vm469, %v402
      %476 = vst.msk [vmem:[%s172 + $0x30] sm:$0xff] %vm469, %v405
      %477 = vst.msk [vmem:[%s172 + $0x38] sm:$0xff] %vm469, %v407
      %478 = vst.msk [vmem:[%s172 + $0x40] sm:$0xff] %vm469, %v410
      %479 = vst.msk [vmem:[%s172 + $0x48] sm:$0xff] %vm469, %v412
      %480 = vst.msk [vmem:[%s172 + $0x50] sm:$0xff] %vm469, %v415
      %481 = vst.msk [vmem:[%s172 + $0x58] sm:$0xff] %vm469, %v417
      %482 = vst.msk [vmem:[%s172 + $0x60] sm:$0xff] %vm469, %v420
      %483 = vst.msk [vmem:[%s172 + $0x68] sm:$0xff] %vm469, %v422
      %484 = vst.msk [vmem:[%s172 + $0x70] sm:$0xff] %vm469, %v425
      %485 = vst.msk [vmem:[%s172 + $0x78] sm:$0xff] %vm469, %v427
      %486 = vst.msk [vmem:[%s172 + $0x80] sm:$0xff] %vm469, %v430
      %487 = vst.msk [vmem:[%s172 + $0x88] sm:$0xff] %vm469, %v432
      %488 = vst.msk [vmem:[%s172 + $0x90] sm:$0xff] %vm469, %v435
      %489 = vst.msk [vmem:[%s172 + $0x98] sm:$0xff] %vm469, %v437
      %490 = vst.msk [vmem:[%s172 + $0xa0] sm:$0xff] %vm469, %v440
      %491 = vst.msk [vmem:[%s172 + $0xa8] sm:$0xff] %vm469, %v442
      %492 = vst.msk [vmem:[%s172 + $0xb0] sm:$0xff] %vm469, %v445
      %493 = vst.msk [vmem:[%s172 + $0xb8] sm:$0xff] %vm469, %v447
      %494 = vst.msk [vmem:[%s172 + $0xc0] sm:$0xff] %vm469, %v450
      %495 = vst.msk [vmem:[%s172 + $0xc8] sm:$0xff] %vm469, %v452
      %496 = vst.msk [vmem:[%s172 + $0xd0] sm:$0xff] %vm469, %v455
      %497 = vst.msk [vmem:[%s172 + $0xd8] sm:$0xff] %vm469, %v457
      %498 = vst.msk [vmem:[%s172 + $0xe0] sm:$0xff] %vm469, %v460
      %499 = vst.msk [vmem:[%s172 + $0xe8] sm:$0xff] %vm469, %v462
      %500 = vst.msk [vmem:[%s172 + $0xf0] sm:$0xff] %vm469, %v465
      %501 = vst.msk [vmem:[%s172 + $0xf8] sm:$0xff] %vm469, %v467
      %s502 = smul.u32 32, %s14
      %p503 = scmp.lt.s32.totalorder %s502, 63
      %s504 = scalar_select %p503, %s502, 63
      %s505 = smul.addr %s504, 8
      %s506 = scalar_lea.vmem %s3, %s505
      // Predicated region
      $region33: #{_complex_conv2d_forward.1} parent=31 // pred_check
        %p507 = pneg %p100
      $region34: #{_complex_conv2d_forward.1} parent=31 // pred_check_branch
        %509 = sbr.rel (%p507) target = $region36
      $region35: #{_complex_conv2d_forward.1} parent=31 // pred_region
        %s510 = smul.u32 32, %s14
      $region36: #{_complex_conv2d_forward.1} parent=31 // pred_fallthru
        _
    $region32: #{_complex_conv2d_forward.1} parent=5 // pred_fallthru
      _
    %p511 = scmp.le.s32.totalorder 2, %s9
    // Predicated region
    $region37: #{_complex_conv2d_forward.1} parent=5 // pred_check
      %p512 = pneg %p511
    $region38: #{_complex_conv2d_forward.1} parent=5 // pred_check_branch
      %514 = sbr.rel (%p512) target = $region40
    $region39: #{_complex_conv2d_forward.1} parent=5 // pred_region
      %s515 = ssub.s32 %s9, 2
      // Predicated region
      $region41: #{_complex_conv2d_forward.1} parent=39 // pred_check
        %p516 = pneg %p106
      $region42: #{_complex_conv2d_forward.1} parent=39 // pred_check_branch
        %518 = sbr.rel (%p516) target = $region44
      $region43: #{_complex_conv2d_forward.1} parent=39 // pred_region
        %s519 = smul.u32 32, %s15
        %p520 = scmp.lt.s32.totalorder %s519, 63
        %s521 = scalar_select %p520, %s519, 63
        %s522 = smul.addr %s521, 8
        %s523 = scalar_lea.vmem %s3, %s522
      $region44: #{_complex_conv2d_forward.1} parent=39 // pred_fallthru
        _
    $region40: #{_complex_conv2d_forward.1} parent=5 // pred_fallthru
      _
  $region6: #{_complex_conv2d_forward.1} parent=0 // loop_footer
    %s13 = sadd.s32 1, %s9
  $region7: #{_complex_conv2d_forward.1} parent=0 // loop_footer_branch
    %8 = sbr.rel target = $region3
  $region8: #{_complex_conv2d_forward.1} parent=0 // loop_exit
    _

</llo_original>
